<compile_context>
chip_gen: v7x
topology: tpu7x:2x2x1
jax: 0.10.0
libtpu: 0.0.40
codegen_flags: <defaults>
</compile_context>

<pallas_src>
import functools

import numpy as np

import jax
import jax.numpy as jnp
from jax.experimental import pallas as pl
from jax.experimental.pallas import tpu as pltpu

_BF16 = jnp.bfloat16
_F32 = jnp.float32

_VMEM_SPEC = pl.BlockSpec(memory_space=pltpu.MemorySpace.VMEM)


# ----------------------------------------------------------------------------
# One-time pltpu.roll probe (direction + bf16 support).  Startup-only cost.
# ----------------------------------------------------------------------------
def _probe_roll():
    """Returns (sign, bf16_roll_ok).

    sign == -1 means pltpu.roll matches jnp.roll (result[i] = x[i - shift]);
    the conv kernels need x_shifted[p] = x[p + delta], i.e. shift=sign*delta.
    bf16_roll_ok is True iff a 16-bit lane rotation lowers and gives the same
    direction (then rolls / boundary masks run in bf16).
    """
    def k(x_ref, o_ref):
        o_ref[...] = pltpu.roll(x_ref[...], 1, axis=1)

    base = jnp.tile(jnp.arange(128, dtype=_F32)[None, :], (8, 1))
    y = pl.pallas_call(k, out_shape=jax.ShapeDtypeStruct((8, 128), _F32),
                       in_specs=[_VMEM_SPEC], out_specs=_VMEM_SPEC)(base)
    sign = -1 if float(jax.device_get(y)[0, 0]) > 64.0 else 1
    expected = 127.0 if sign == -1 else 1.0

    bf16_ok = False
    try:
        xb = jnp.tile(jnp.arange(128, dtype=_F32)[None, :], (16, 1)).astype(_BF16)
        yb = pl.pallas_call(k, out_shape=jax.ShapeDtypeStruct((16, 128), _BF16),
                            in_specs=[_VMEM_SPEC], out_specs=_VMEM_SPEC)(xb)
        bf16_ok = float(jax.device_get(yb)[0, 0]) == expected
    except Exception:
        bf16_ok = False   # fall back to f32 rolls (still stacked-K matmul)
    return sign, bf16_ok


# ----------------------------------------------------------------------------
# Trace-time geometry constants (shifts / masks / selection & pooling matrices)
# ----------------------------------------------------------------------------
def _make_geometry(N, H, W, roll_sign, mask_dtype):
    """Per-resolution constants for the in-kernel 'roll + mask' 3x3 conv."""
    M = N * H * W
    ii = np.arange(H)[:, None]
    jj = np.arange(W)[None, :]
    shifts, masks = [], []
    for di in (-1, 0, 1):
        for dj in (-1, 0, 1):
            shifts.append(int((roll_sign * (di * W + dj)) % M))
            ok = (ii + di >= 0) & (ii + di < H) & (jj + dj >= 0) & (jj + dj < W)
            masks.append(np.broadcast_to(ok, (N, H, W)).reshape(M))
    # Only the centre tap may have shift 0 (true for H, W >= 2).
    assert shifts[4] == 0 and shifts.count(0) == 1
    masks = np.stack(masks).astype(np.float32).reshape(9, 1, M)
    return dict(M=M, shifts=tuple(shifts),
                masks=jnp.asarray(masks, dtype=mask_dtype))


def _make_select_even(N, H, W):
    """0/1 matrix (N*H*W, N*(H//2)*(W//2)) selecting even (i, j) sites."""
    Ho, Wo = H // 2, W // 2
    S = np.zeros((N * H * W, N * Ho * Wo), np.float32)
    for n in range(N):
        for io in range(Ho):
            for jo in range(Wo):
                S[(n * H + 2 * io) * W + 2 * jo, (n * Ho + io) * Wo + jo] = 1.0
    return jnp.asarray(S, dtype=_BF16)


def _make_pool(N, H, W):
    """(N*H*W, N) matrix: global average pool per image as a matmul."""
    P = np.zeros((N * H * W, N), np.float32)
    for n in range(N):
        P[n * H * W:(n + 1) * H * W, n] = 1.0 / (H * W)
    return jnp.asarray(P, dtype=_BF16)


# ----------------------------------------------------------------------------
# The single fused kernel
# ----------------------------------------------------------------------------
def _nmts_kernel(*refs, plan, shifts_per_level, bf16_roll):
    o_ref = refs[-1]

    def load(i):
        return refs[i][...]

    def conv3x3(x_f32, w_idx, lvl):
        """3x3 'same' conv, lane-dense (C, M) layout, ONE stacked-K MXU pass.

        x_f32 : (Cin, M) f32 value
        w_idx : index of the (Cout, 9*Cin) bf16 flattened weight
        lvl   : resolution level (selects shifts + boundary masks)
        """
        w_flat = load(w_idx)                         # (Cout, 9*Cin) bf16
        m_ref = refs[plan["masks"][lvl]]             # (9, 1, M) mask ref
        xb = x_f32.astype(_BF16)
        pieces = []
        for t, s in enumerate(shifts_per_level[lvl]):
            if s == 0:                               # centre tap: no shift/mask
                pieces.append(xb)
            elif bf16_roll:                          # bf16 roll + bf16 mask
                pieces.append(pltpu.roll(xb, s, axis=1) * m_ref[t])
            else:                                    # f32 fallback path
                pieces.append(
                    (pltpu.roll(x_f32, s, axis=1) * m_ref[t]).astype(_BF16))
        stacked = jnp.concatenate(pieces, axis=0)    # (9*Cin, M) bf16
        return jnp.dot(w_flat, stacked, preferred_element_type=_F32)

    # --- Shallow extractor: grouped 3x3 conv (block-diag weight) + bias + ReLU
    feat = jnp.maximum(conv3x3(load(plan["x"]), plan["se"]["w"], 0)
                       + load(plan["se"]["b"]), 0.0)

    # --- Deep extractor: BasicBlocks, all intermediates stay on-chip
    for bd in plan["blocks"]:
        if bd["stride"] == 1:
            lvl = bd["lout"]
            h = jnp.maximum(conv3x3(feat, bd["w1"], lvl) + load(bd["b1"]), 0.0)
            y = conv3x3(h, bd["w2"], lvl) + load(bd["b2"])
            feat = jnp.maximum(y + feat, 0.0)
        else:
            C = feat.shape[0]
            # conv1 (stride 2) = stride-1 conv at full res + even-site select.
            h_full = conv3x3(feat, bd["w1"], bd["lin"])          # (C, Min) f32
            # Merge conv1-output and 1x1-shortcut-input downsampling into one
            # (2C, Min) @ (Min, Mout) selection matmul.
            both = jnp.concatenate(
                [h_full.astype(_BF16), feat.astype(_BF16)], axis=0)
            ds = jnp.dot(both, load(bd["sel"]), preferred_element_type=_F32)
            h = jnp.maximum(ds[:C] + load(bd["b1"]), 0.0)        # (C, Mout)
            x_ds = ds[C:]                                        # (C, Mout)
            y = conv3x3(h, bd["w2"], bd["lout"]) + load(bd["b2"])
            sc = jnp.dot(load(bd["wd"]), x_ds.astype(_BF16),
                         preferred_element_type=_F32) + load(bd["bd"])
            feat = jnp.maximum(y + sc, 0.0)

    # --- Heads: global avg pool (matmul) + all classifiers fused (concat'd W)
    pooled = jnp.dot(feat.astype(_BF16), load(plan["pool"]),
                     preferred_element_type=_F32)                # (C, N)
    logits = jnp.dot(load(plan["head_w"]), pooled.astype(_BF16),
                     preferred_element_type=_F32)                # (K, N)
    o_ref[...] = logits + load(plan["head_b"])


# ----------------------------------------------------------------------------
# Parameters (PyTorch layouts, f32) and kernel-format preparation
# ----------------------------------------------------------------------------
def _winit(key, shape, scale=0.1):
    return (scale * jax.random.normal(key, shape)).astype(_F32)


def init_nmts_params(key, cfg):
    C_in, groups, C = cfg["inchannel_SE"], cfg["groups_SE"], cfg["inchannel_DE"]
    params = {}
    key, k1, k2 = jax.random.split(key, 3)
    params["se_w"] = _winit(k1, (C, C_in // groups, 3, 3))   # grouped conv
    params["se_b"] = _winit(k2, (C,))
    blocks = []
    for n_blocks, stride in zip(cfg["layers_DE"], cfg["strides_DE"]):
        for bi in range(n_blocks):
            st = stride if bi == 0 else 1
            key, ka, kb, kc, kd, ke, kf = jax.random.split(key, 7)
            blk = {"w1": _winit(ka, (C, C, 3, 3)), "b1": _winit(kb, (C,)),
                   "w2": _winit(kc, (C, C, 3, 3)), "b2": _winit(kd, (C,)),
                   "stride": st}
            if st != 1:
                blk["down_w"] = _winit(ke, (C, C, 1, 1))
                blk["down_b"] = _winit(kf, (C,))
            blocks.append(blk)
    params["blocks"] = blocks
    heads = []
    for ncat in cfg["num_categories"]:
        key, kw, kb2 = jax.random.split(key, 3)
        heads.append({"w": _winit(kw, (cfg["inchannel_Cl"], ncat)),
                      "b": _winit(kb2, (ncat,))})
    params["heads"] = heads
    return params


def _taps(w):
    """(Cout, Cin, 3, 3) -> (9, Cout, Cin), tap index t = kh*3 + kw."""
    cout, cin = w.shape[0], w.shape[1]
    return jnp.transpose(w, (2, 3, 0, 1)).reshape(9, cout, cin)


def _flatten_taps(t9):
    """(9, Cout, Cin) -> contiguous lane-dense (Cout, 9*Cin), col = t*Cin+c."""
    _, cout, cin = t9.shape
    return jnp.transpose(t9, (1, 0, 2)).reshape(cout, 9 * cin).astype(_BF16)


def prepare_kernel_params(params, cfg):
    groups = cfg["groups_SE"]
    se_w = params["se_w"]                       # (Cout, Cin/groups, 3, 3)
    cout, cin_g = se_w.shape[0], se_w.shape[1]
    cin = cin_g * groups
    cin_pad = -(-cin // 16) * 16                # bf16 sublane tile = 16 rows
    cout_g = cout // groups
    t = _taps(se_w)                             # (9, Cout, Cin/groups)
    # Block-diagonal grouped-conv weight: one matmul covers all groups.
    wbd = jnp.zeros((9, cout, cin_pad), _F32)
    for gidx in range(groups):
        wbd = wbd.at[:, gidx * cout_g:(gidx + 1) * cout_g,
                     gidx * cin_g:(gidx + 1) * cin_g].set(
                         t[:, gidx * cout_g:(gidx + 1) * cout_g, :])
    kp = {"se": {"w": _flatten_taps(wbd),
                 "b": params["se_b"].reshape(-1, 1).astype(_F32),
                 "cin_pad": cin_pad}}
    kb_list = []
    for blk in params["blocks"]:
        kb = {"stride": blk["stride"],
              "w1": _flatten_taps(_taps(blk["w1"])),
              "b1": blk["b1"].reshape(-1, 1).astype(_F32),
              "w2": _flatten_taps(_taps(blk["w2"])),
              "b2": blk["b2"].reshape(-1, 1).astype(_F32)}
        if blk["stride"] != 1:
            kb["wd"] = blk["down_w"][:, :, 0, 0].astype(_BF16)
            kb["bd"] = blk["down_b"].reshape(-1, 1).astype(_F32)
        kb_list.append(kb)
    kp["blocks"] = kb_list
    # All heads fused: concat along the category axis, split after the kernel.
    w_cat = jnp.concatenate([h["w"] for h in params["heads"]], axis=1)  # (C, K)
    b_cat = jnp.concatenate([h["b"] for h in params["heads"]])          # (K,)
    kp["heads"] = {"w": jnp.transpose(w_cat).astype(_BF16),
                   "b": b_cat.reshape(-1, 1).astype(_F32)}
    return kp


# ----------------------------------------------------------------------------
# Forward pass (single fused pallas_call) and pure-JAX reference
# ----------------------------------------------------------------------------
def nmts_forward(x_nchw, kp, cfg, roll_sign, bf16_roll):
    N, Cin, H, W = x_nchw.shape
    cin_pad = kp["se"]["cin_pad"]
    C = int(kp["se"]["b"].shape[0])
    K = int(kp["heads"]["w"].shape[0])
    mask_dtype = _BF16 if bf16_roll else _F32

    # NCHW -> lane-dense (C, N*H*W): channels on sublanes, flattened
    # batch x spatial on the 128-wide lane axis.
    x = jnp.transpose(x_nchw, (1, 0, 2, 3)).reshape(Cin, N * H * W).astype(_F32)
    if cin_pad != Cin:
        x = jnp.pad(x, ((0, cin_pad - Cin), (0, 0)))

    # Build the flat argument list + a static "plan" (arg indices & metadata)
    # captured by the kernel closure.
    args = []

    def add(a):
        args.append(a)
        return len(args) - 1

    geoms = [_make_geometry(N, H, W, roll_sign, mask_dtype)]
    plan = {"x": add(x),
            "se": {"w": add(kp["se"]["w"]), "b": add(kp["se"]["b"])},
            "masks": [add(geoms[0]["masks"])],
            "blocks": []}
    flops = 2 * C * (9 * cin_pad) * (N * H * W)

    h, w = H, W
    for bp in kp["blocks"]:
        lin = len(geoms) - 1
        if bp["stride"] == 1:
            M = N * h * w
            d = {"stride": 1, "lout": lin,
                 "w1": add(bp["w1"]), "b1": add(bp["b1"]),
                 "w2": add(bp["w2"]), "b2": add(bp["b2"])}
            flops += 2 * 2 * C * (9 * C) * M
        else:
            assert h % 2 == 0 and w % 2 == 0, "stride-2 block needs even H, W"
            Min = N * h * w
            sel = _make_select_even(N, h, w)
            h, w = h // 2, w // 2
            Mout = N * h * w
            g = _make_geometry(N, h, w, roll_sign, mask_dtype)
            geoms.append(g)
            plan["masks"].append(add(g["masks"]))
            d = {"stride": 2, "lin": lin, "lout": len(geoms) - 1,
                 "w1": add(bp["w1"]), "b1": add(bp["b1"]),
                 "w2": add(bp["w2"]), "b2": add(bp["b2"]),
                 "wd": add(bp["wd"]), "bd": add(bp["bd"]),
                 "sel": add(sel)}
            flops += (2 * C * (9 * C) * Min + 2 * (2 * C) * Min * Mout
                      + 2 * C * (9 * C) * Mout + 2 * C * C * Mout)
        plan["blocks"].append(d)

    M_last = N * h * w
    plan["pool"] = add(_make_pool(N, h, w))
    plan["head_w"] = add(kp["heads"]["w"])
    plan["head_b"] = add(kp["heads"]["b"])
    flops += 2 * C * M_last * N + 2 * K * C * N

    shifts_per_level = tuple(g["shifts"] for g in geoms)
    bytes_accessed = K * N * 4 + sum(
        int(a.size) * a.dtype.itemsize for a in args)

    out = pl.pallas_call(
        functools.partial(_nmts_kernel, plan=plan,
                          shifts_per_level=shifts_per_level,
                          bf16_roll=bf16_roll),
        out_shape=jax.ShapeDtypeStruct((K, N), _F32),
        in_specs=[_VMEM_SPEC] * len(args),
        out_specs=_VMEM_SPEC,
        cost_estimate=pl.CostEstimate(flops=int(flops), transcendentals=0,
                                      bytes_accessed=int(bytes_accessed)),
    )(*args)

    logits = jnp.transpose(out)                     # (N, K)
    preds, off = [], 0
    for ncat in cfg["num_categories"]:
        preds.append(logits[:, off:off + ncat])
        off += ncat
    return preds


def _conv_ref(x, w, b, stride, pad, groups=1):
    out = jax.lax.conv_general_dilated(
        x.astype(_BF16), w.astype(_BF16),
        window_strides=(stride, stride), padding=[(pad, pad), (pad, pad)],
        dimension_numbers=("NCHW", "OIHW", "NCHW"),
        feature_group_count=groups, preferred_element_type=_F32)
    return out + b.reshape(1, -1, 1, 1)


def nmts_forward_ref(x_nchw, params, cfg):
    """Pure-JAX reference with the same bf16-operand / f32-accumulate policy."""
    feat = jax.nn.relu(_conv_ref(x_nchw.astype(_F32), params["se_w"],
                                 params["se_b"], 1, 1, cfg["groups_SE"]))
    for blk in params["blocks"]:
        st = blk["stride"]
        sc = feat if st == 1 else _conv_ref(feat, blk["down_w"],
                                            blk["down_b"], st, 0)
        h = jax.nn.relu(_conv_ref(feat, blk["w1"], blk["b1"], st, 1))
        h = _conv_ref(h, blk["w2"], blk["b2"], 1, 1)
        feat = jax.nn.relu(h + sc)
    pooled = jnp.mean(feat, axis=(2, 3))                              # (N, C)
    return [jnp.dot(pooled.astype(_BF16), hd["w"].astype(_BF16),
                    preferred_element_type=_F32) + hd["b"]
            for hd in params["heads"]]


# ----------------------------------------------------------------------------
# Main
# ----------------------------------------------------------------------------
if __name__ == "__main__":
    cfg = dict(
        inchannel_SE=4,
        groups_SE=2,
        layers_DE=[2, 2],
        strides_DE=[1, 2],
        block_DE="basic",
        inchannel_DE=16,
        inchannel_Cl=16,
        num_categories=[5, 7],
    )

    key = jax.random.PRNGKey(0)
    key, kx, kparam = jax.random.split(key, 3)
    params = init_nmts_params(kparam, cfg)
    kparams = prepare_kernel_params(params, cfg)

    # PyTorch-style NCHW input: batch=2, channels=4, 16x16 spatial.
    x = jax.random.normal(kx, (2, 4, 16, 16), dtype=jnp.float32)

    roll_sign, bf16_roll = _probe_roll()

    fwd = jax.jit(
        lambda inp: nmts_forward(inp, kparams, cfg, roll_sign, bf16_roll))
    preds = jax.block_until_ready(fwd(x))

    assert preds[0].shape == (2, 5) and preds[1].shape == (2, 7)

    # Pure-JAX reference check (tolerance sized for the bf16 MXU operands).
    refs = jax.block_until_ready(nmts_forward_ref(x, params, cfg))
    for p_out, r_out in zip(preds, refs):
        err = float(jnp.max(jnp.abs(p_out - r_out)))
        scale = float(jnp.max(jnp.abs(r_out)))
        assert err <= 5e-3 + 0.05 * scale, (err, scale)

    print("KERNEL_OK")
</pallas_src>

<mosaic_0001>
module attributes {stable_mosaic.version = 11 : i64} {
  func.func @k(%arg0: memref<8x128xf32, #tpu.memory_space<vmem>>, %arg1: memref<8x128xf32, #tpu.memory_space<vmem>>) attributes {dimension_semantics = [], scalar_prefetch = 0 : i64, scratch_operands = 0 : i64, tpu.core_type = #tpu.core_type<tc>} {
    %c0 = arith.constant 0 : index
    %c0_0 = arith.constant 0 : index
    %0 = vector.load %arg0[%c0, %c0_0] : memref<8x128xf32, #tpu.memory_space<vmem>>, vector<8x128xf32>
    %c1_i32 = arith.constant 1 : i32
    %1 = tpu.dynamic_rotate %0 by %c1_i32 dim 1 : vector<8x128xf32>, i32 -> vector<8x128xf32>
    %c0_1 = arith.constant 0 : index
    %c0_2 = arith.constant 0 : index
    %2 = vector.load %arg1[%c0_1, %c0_2] : memref<8x128xf32, #tpu.memory_space<vmem>>, vector<8x128xf32>
    tpu.vector_store %arg1[%c0_1, %c0_2], %1 {strides = array<i32>} : memref<8x128xf32, #tpu.memory_space<vmem>>, vector<8x128xf32>,
    return
  }
}

</mosaic_0001>

<llo_original>
// kernel: tpu_custom_call.1
$region0: #{tpu_custom_call.1}
  #allocation0 [shape = 'u32[]', space=smem, size = 0x4, offset = 0x4, fixed_abs, tag = 'smem constant byte address 0x4 - core index']
  #allocation1 [shape = 'u32[144,128]{1,0:T(1,128)}', space=vmem, size = 0x12000, scoped, tag = 'internal scratch']
  %s0 = inlined_call_operand.hbm [shape: f32[8,128], index: 0, kind: input, shape index: {}]
  %s1 = inlined_call_operand.hbm [shape: f32[8,128], index: 1, kind: output, shape index: {}]
  %s2 = sld [smem:[#allocation0]]
  $region18: #{tpu_custom_call.1} parent=0
    _
  %s4 = ssub.s32 1, %s2
  %s5 = scalar_select 0, %s4, %s2
  $region1: #{tpu_custom_call.1} parent=0
    #allocation2 [shape = 'u8[4096]{0}', space=vmem, size = 0x1000, scoped, tag = 'input window, operand 0, single buffered']
    #allocation3 [shape = 's32[1]{0}', space=sflag, size = 0x4, scoped, tag = 'scoped memory for tpu_custom_call.1']
    #allocation4 [shape = 's32[1]{0}', space=sflag, size = 0x4, scoped, tag = 'scoped memory for tpu_custom_call.1']
    #allocation5 [shape = 'u8[4096]{0}', space=vmem, size = 0x1000, scoped, tag = 'output window, operand 0, single buffered']
    %6 = vsyncpa [#allocation3], 0
    %7 = vsyncpa [#allocation4], 0
    // Predicated region
    $region2: #{tpu_custom_call.1} parent=1 // pred_check
      _
    $region3: #{tpu_custom_call.1} parent=1 // pred_check_branch
      %9 = sbr.rel (0) target = $region5
    $region4: #{tpu_custom_call.1} parent=1 // pred_region
      %s11 = ssub.s32 128, 128
      %12 = vsyncadd [#allocation3], %s11
      %s14 = sshll.u32 [#allocation2], 4
      %s15 = int_to_ptr.vmem [resolvable:$true] %s14
      %17 = dma.hbm_to_vmem [thread:$0]  %s0, 128, %s15, [#allocation3]
    $region5: #{tpu_custom_call.1} parent=1 // pred_fallthru
      _
    // Predicated region
    $region6: #{tpu_custom_call.1} parent=1 // pred_check
      _
    $region7: #{tpu_custom_call.1} parent=1 // pred_check_branch
      %19 = sbr.rel (0) target = $region9
    $region8: #{tpu_custom_call.1} parent=1 // pred_region
      %20 = dma.done [#allocation3], 128
    $region9: #{tpu_custom_call.1} parent=1 // pred_fallthru
      _
    %v21 = vld [vmem:[#allocation2] sm:$0xff]
    %22 = vrot.lane.b32.xlu0 %v21, 1
    %v23 = vpop.permute.xlu0 %22
    %24 = vst [vmem:[#allocation5] sm:$0xff] %v23
    // Predicated region
    $region10: #{tpu_custom_call.1} parent=1 // pred_check
      _
    $region11: #{tpu_custom_call.1} parent=1 // pred_check_branch
      %26 = sbr.rel (0) target = $region13
    $region12: #{tpu_custom_call.1} parent=1 // pred_region
      %s28 = ssub.s32 128, 128
      %29 = vsyncadd [#allocation4], %s28
      %s31 = sshll.u32 [#allocation5], 4
      %s32 = int_to_ptr.vmem [resolvable:$true] %s31
      %34 = dma.vmem_to_hbm [thread:$0]  %s32, 128, %s1, [#allocation4]
    $region13: #{tpu_custom_call.1} parent=1 // pred_fallthru
      _
    // Predicated region
    $region14: #{tpu_custom_call.1} parent=1 // pred_check
      _
    $region15: #{tpu_custom_call.1} parent=1 // pred_check_branch
      %36 = sbr.rel (0) target = $region17
    $region16: #{tpu_custom_call.1} parent=1 // pred_region
      %37 = dma.done [#allocation4], 128
    $region17: #{tpu_custom_call.1} parent=1 // pred_fallthru
      _
    %38 = vsyncpa [#allocation3], 1
    %39 = vsyncpa [#allocation4], 1

</llo_original>
